<compile_context>
chip_gen: v6e
topology: v6e:2x2x1
jax: 0.10.0
libtpu: 0.0.40
codegen_flags: <defaults>
</compile_context>

<pallas_src>
import functools

import jax
import jax.numpy as jnp
from jax.experimental import pallas as pl
from jax.experimental.pallas import tpu as pltpu


def _round_up(n, m):
    return ((n + m - 1) // m) * m


def _is_v7x():
    try:
        kind = jax.devices()[0].device_kind.lower()
    except Exception:
        return False
    return "7" in kind


def _fused_rbfnn_kernel(*refs, gammas, lane_dense_out):
    """refs = (x, [ct_0, ngcsq_0, ct_1, ngcsq_1, ...], w_row, b_smem, out)."""
    n_layers = len(gammas)
    x_ref = refs[0]
    layer_refs = refs[1:1 + 2 * n_layers]
    w_ref = refs[1 + 2 * n_layers]                 # (1, C_last) f32 row
    b_ref = refs[2 + 2 * n_layers]                 # (1,) scalar in SMEM
    o_ref = refs[3 + 2 * n_layers]                 # (1, TB) or (TB, 1)

    h = x_ref[...]                                 # (TB, F) f32
    for i, gamma in enumerate(gammas):
        ct = layer_refs[2 * i][...]                # (F_prev, C), pre-scaled by 2*gamma
        ngc = layer_refs[2 * i + 1][...]           # (1, C) = -gamma * ||c||^2
        # exp(-g*||h-c||^2) == exp( (h @ 2g*c^T) - g*||h||^2 - g*||c||^2 )
        x2 = jnp.sum(h * h, axis=-1, keepdims=True)               # (TB, 1), XLU reduce
        h_in = h if ct.dtype == h.dtype else h.astype(ct.dtype)   # optional bf16 MXU path
        xc = jnp.dot(h_in, ct, preferred_element_type=jnp.float32)  # (TB, C) on MXU
        arg = jnp.minimum(xc - gamma * x2 + ngc, 0.0)              # clamp f32 roundoff
        h = jnp.exp(arg)                                           # EUP

    # Dropout(0.3): identity in eval mode.
    w = w_ref[...]                                                 # (1, C_last)
    col = jnp.sum(h * w, axis=-1, keepdims=True) + b_ref[0]        # (TB, 1) VPU + XLU
    if lane_dense_out:
        o_ref[...] = jnp.transpose(col)                            # (1, TB) lane-dense store
    else:
        o_ref[...] = col                                           # conservative fallback


_WORKING_CONFIG = None  # (single_buffer_consts, lane_dense_out) proven to lower on this jax


def rbfnn_forward(x, centers_t, neg_gcsq, gammas, w_row, b, *, block_b=None):
    """Fused forward pass: all RBF layers + Linear in one pallas_call."""
    global _WORKING_CONFIG
    B, F = x.shape
    n_layers = len(gammas)
    assert len(centers_t) == n_layers and len(neg_gcsq) == n_layers

    is_v7x = _is_v7x()
    if block_b is None:
        # v7x: smaller tile (64 MiB VMEM) and >=2 grid steps for its 2 TensorCores.
        tile_cap = 512 if is_v7x else 1024
        block_b = _round_up(B, 8) if B <= tile_cap else tile_cap
    B_pad = _round_up(B, block_b)
    if B_pad != B:
        # Pad the batch up to the tile instead of shrinking the tile.
        x = jnp.pad(x, ((0, B_pad - B), (0, 0)))
    grid = (B_pad // block_b,)

    # Explicit VMEM budget: resident constants (possibly double-buffered) +
    # x/out tiles + (block_b, C) layer intermediates.
    max_c = max(ct.shape[1] for ct in centers_t)
    const_bytes = (sum(ct.size + c2.size for ct, c2 in zip(centers_t, neg_gcsq))
                   + w_row.size) * 4
    act_bytes = block_b * (2 * F + 2 + 4 * max_c) * 4
    cap = (48 << 20) if is_v7x else (64 << 20)
    vmem_limit = int(min(max(2 * (2 * const_bytes + act_bytes), 32 << 20), cap))

    operands = [x]
    for ct, c2 in zip(centers_t, neg_gcsq):
        operands += [ct, c2]
    operands += [w_row, b]

    def _build(single_buffer_consts, lane_dense_out):
        # Constant-index_map inputs never need double buffering.
        const_kw = dict(pipeline_mode=pl.Buffered(1)) if single_buffer_consts else {}
        in_specs = [pl.BlockSpec((block_b, F), lambda i: (i, 0))]
        for ct, c2 in zip(centers_t, neg_gcsq):
            in_specs.append(pl.BlockSpec(ct.shape, lambda i: (0, 0), **const_kw))
            in_specs.append(pl.BlockSpec(c2.shape, lambda i: (0, 0), **const_kw))
        in_specs.append(pl.BlockSpec(w_row.shape, lambda i: (0, 0), **const_kw))
        in_specs.append(pl.BlockSpec(memory_space=pltpu.MemorySpace.SMEM))  # bias scalar
        if lane_dense_out:
            out_shape = jax.ShapeDtypeStruct((1, B_pad), jnp.float32)
            out_spec = pl.BlockSpec((1, block_b), lambda i: (0, i))
        else:
            out_shape = jax.ShapeDtypeStruct((B_pad, 1), jnp.float32)
            out_spec = pl.BlockSpec((block_b, 1), lambda i: (i, 0))
        kernel = functools.partial(
            _fused_rbfnn_kernel,
            gammas=tuple(float(g) for g in gammas),
            lane_dense_out=lane_dense_out,
        )
        return pl.pallas_call(
            kernel,
            out_shape=out_shape,
            grid=grid,
            in_specs=in_specs,
            out_specs=out_spec,
            compiler_params=pltpu.CompilerParams(
                dimension_semantics=("parallel",),
                vmem_limit_bytes=vmem_limit,
            ),
        )

    def _post(out, lane_dense_out):
        if lane_dense_out:
            return out[0, :B][:, None]
        return out[:B]

    if _WORKING_CONFIG is not None:
        sb, ld = _WORKING_CONFIG
        return _post(_build(sb, ld)(*operands), ld)

    # Prefer the fully optimized build; fall back gracefully if this jax
    # version rejects Buffered(1) or the lane-dense (1, TB) store.
    last_err = None
    for sb, ld in ((True, True), (False, True), (False, False)):
        try:
            out = jax.block_until_ready(_build(sb, ld)(*operands))
            _WORKING_CONFIG = (sb, ld)
            return _post(out, ld)
        except Exception as e:  # noqa: BLE001 - retry with a more conservative build
            last_err = e
    raise last_err


class RBFNN:
    """JAX/Pallas port of the PyTorch RBFNN (inference semantics)."""

    def __init__(self, in_features, rbf_layers_config, key, use_bf16=False):
        self.rbf_layers_config = list(rbf_layers_config)
        self.gammas = [float(g) for _, g in self.rbf_layers_config]
        self.centers = []      # (C, F) raw centers (PyTorch layout) for the reference
        self.centers_t = []    # (F, C) pre-transposed, pre-scaled by 2*gamma
        self.neg_gcsq = []     # (1, C) = -gamma * ||c||^2
        prev_units = in_features
        for num_centers, gamma in self.rbf_layers_config:
            key, sub = jax.random.split(key)
            # nn.init.normal_(centers, 0, 1)
            c = jax.random.normal(sub, (num_centers, prev_units), dtype=jnp.float32)
            self.centers.append(c)
            ct = (2.0 * float(gamma)) * c.T
            self.centers_t.append(ct.astype(jnp.bfloat16) if use_bf16 else ct)
            self.neg_gcsq.append((-float(gamma)) * jnp.sum(c * c, axis=-1)[None, :])
            prev_units = num_centers
        # nn.Linear(prev_units, 1): uniform(-1/sqrt(fan_in), 1/sqrt(fan_in))
        key, kw, kb = jax.random.split(key, 3)
        bound = 1.0 / (prev_units ** 0.5)
        self.w = jax.random.uniform(
            kw, (prev_units, 1), jnp.float32, minval=-bound, maxval=bound
        )
        self.w_row = jnp.asarray(self.w.T)   # (1, C_last) lane-dense row for the kernel
        self.b = jax.random.uniform(
            kb, (1,), jnp.float32, minval=-bound, maxval=bound
        )

    def __call__(self, x):
        return rbfnn_forward(
            x, self.centers_t, self.neg_gcsq, self.gammas, self.w_row, self.b
        )


def _reference(model, x):
    # pure-JAX reference matching the PyTorch forward (eval mode)
    for c, (_, gamma) in zip(model.centers, model.rbf_layers_config):
        d = x[:, None, :] - c[None, :, :]
        dist = jnp.sqrt(jnp.sum(d * d, axis=2))
        x = jnp.exp(-gamma * dist ** 2)
    return x @ model.w + model.b[None, :]


if __name__ == "__main__":
    key = jax.random.PRNGKey(0)
    key, kx, kp = jax.random.split(key, 3)

    batch = 8
    in_features = 16
    rbf_layers_config = [(32, 0.5), (16, 1.0)]

    x = jax.random.normal(kx, (batch, in_features), dtype=jnp.float32)
    model = RBFNN(in_features, rbf_layers_config, kp)

    out = model(x)
    out = jax.block_until_ready(out)

    ref = _reference(model, x)
    assert out.shape == (batch, 1), out.shape
    assert jnp.allclose(out, ref, atol=1e-4, rtol=1e-4), (out, ref)

    print("KERNEL_OK")
</pallas_src>

<mosaic_0001>
module attributes {stable_mosaic.version = 11 : i64} {
  func.func @_fused_rbfnn_kernel(%arg0: i32, %arg1: memref<8x16xf32, #tpu.memory_space<vmem>>, %arg2: memref<16x32xf32, #tpu.memory_space<vmem>>, %arg3: memref<1x32xf32, #tpu.memory_space<vmem>>, %arg4: memref<32x16xf32, #tpu.memory_space<vmem>>, %arg5: memref<1x16xf32, #tpu.memory_space<vmem>>, %arg6: memref<1x16xf32, #tpu.memory_space<vmem>>, %arg7: memref<1xf32, #tpu.memory_space<smem>>, %arg8: memref<1x8xf32, #tpu.memory_space<vmem>>) attributes {dimension_semantics = [#tpu.dimension_semantics<parallel>], iteration_bounds = array<i64: 1>, scalar_prefetch = 0 : i64, scratch_operands = 0 : i64, tpu.core_type = #tpu.core_type<tc>, window_params = [{transform_indices = @transform_0, window_bounds = array<i64: 8, 16>}, {pipeline_mode = #tpu.pipeline_mode<synchronous>, transform_indices = @transform_1, window_bounds = array<i64: 16, 32>}, {pipeline_mode = #tpu.pipeline_mode<synchronous>, transform_indices = @transform_2, window_bounds = array<i64: 1, 32>}, {pipeline_mode = #tpu.pipeline_mode<synchronous>, transform_indices = @transform_3, window_bounds = array<i64: 32, 16>}, {pipeline_mode = #tpu.pipeline_mode<synchronous>, transform_indices = @transform_4, window_bounds = array<i64: 1, 16>}, {pipeline_mode = #tpu.pipeline_mode<synchronous>, transform_indices = @transform_5, window_bounds = array<i64: 1, 16>}, {transform_indices = @transform_6, window_bounds = array<i64: 1>}, {transform_indices = @transform_7, window_bounds = array<i64: 1, 8>}]} {
    %c0 = arith.constant 0 : index
    %c0_0 = arith.constant 0 : index
    %0 = vector.load %arg1[%c0, %c0_0] : memref<8x16xf32, #tpu.memory_space<vmem>>, vector<8x16xf32>
    %c0_1 = arith.constant 0 : index
    %c0_2 = arith.constant 0 : index
    %1 = vector.load %arg2[%c0_1, %c0_2] : memref<16x32xf32, #tpu.memory_space<vmem>>, vector<16x32xf32>
    %c0_3 = arith.constant 0 : index
    %c0_4 = arith.constant 0 : index
    %2 = vector.load %arg3[%c0_3, %c0_4] : memref<1x32xf32, #tpu.memory_space<vmem>>, vector<1x32xf32>
    %3 = arith.mulf %0, %0 : vector<8x16xf32>
    %cst = arith.constant dense<0.000000e+00> : vector<8xf32>
    %4 = vector.multi_reduction <add>, %3, %cst [1] : vector<8x16xf32> to vector<8xf32>
    %5 = vector.shape_cast %4 : vector<8xf32> to vector<8x1xf32>
    %cst_5 = arith.constant dense<0.000000e+00> : vector<8x32xf32>
    %6 = tpu.matmul %0, %1, %cst_5 {dimension_numbers = #tpu.dot_dimension_numbers<[1], [0], [0], [1], [0, 0, 1, 1], [], []>} : vector<8x16xf32>, vector<16x32xf32>, vector<8x32xf32> -> vector<8x32xf32>
    %cst_6 = arith.constant 5.000000e-01 : f32
    %7 = vector.broadcast %cst_6 : f32 to vector<8x1xf32>
    %8 = arith.mulf %7, %5 : vector<8x1xf32>
    %9 = vector.broadcast %8 : vector<8x1xf32> to vector<8x32xf32>
    %10 = arith.subf %6, %9 : vector<8x32xf32>
    %11 = vector.broadcast %2 : vector<1x32xf32> to vector<8x32xf32>
    %12 = arith.addf %10, %11 : vector<8x32xf32>
    %cst_7 = arith.constant 0.000000e+00 : f32
    %13 = vector.broadcast %cst_7 : f32 to vector<8x32xf32>
    %14 = arith.minimumf %12, %13 : vector<8x32xf32>
    %15 = math.exp %14 : vector<8x32xf32>
    %c0_8 = arith.constant 0 : index
    %c0_9 = arith.constant 0 : index
    %16 = vector.load %arg4[%c0_8, %c0_9] : memref<32x16xf32, #tpu.memory_space<vmem>>, vector<32x16xf32>
    %c0_10 = arith.constant 0 : index
    %c0_11 = arith.constant 0 : index
    %17 = vector.load %arg5[%c0_10, %c0_11] : memref<1x16xf32, #tpu.memory_space<vmem>>, vector<1x16xf32>
    %18 = arith.mulf %15, %15 : vector<8x32xf32>
    %cst_12 = arith.constant dense<0.000000e+00> : vector<8xf32>
    %19 = vector.multi_reduction <add>, %18, %cst_12 [1] : vector<8x32xf32> to vector<8xf32>
    %20 = vector.shape_cast %19 : vector<8xf32> to vector<8x1xf32>
    %cst_13 = arith.constant dense<0.000000e+00> : vector<8x16xf32>
    %21 = tpu.matmul %15, %16, %cst_13 {dimension_numbers = #tpu.dot_dimension_numbers<[1], [0], [0], [1], [0, 0, 1, 1], [], []>} : vector<8x32xf32>, vector<32x16xf32>, vector<8x16xf32> -> vector<8x16xf32>
    %cst_14 = arith.constant 1.000000e+00 : f32
    %22 = vector.broadcast %cst_14 : f32 to vector<8x1xf32>
    %23 = arith.mulf %22, %20 : vector<8x1xf32>
    %24 = vector.broadcast %23 : vector<8x1xf32> to vector<8x16xf32>
    %25 = arith.subf %21, %24 : vector<8x16xf32>
    %26 = vector.broadcast %17 : vector<1x16xf32> to vector<8x16xf32>
    %27 = arith.addf %25, %26 : vector<8x16xf32>
    %cst_15 = arith.constant 0.000000e+00 : f32
    %28 = vector.broadcast %cst_15 : f32 to vector<8x16xf32>
    %29 = arith.minimumf %27, %28 : vector<8x16xf32>
    %30 = math.exp %29 : vector<8x16xf32>
    %c0_16 = arith.constant 0 : index
    %c0_17 = arith.constant 0 : index
    %31 = vector.load %arg6[%c0_16, %c0_17] : memref<1x16xf32, #tpu.memory_space<vmem>>, vector<1x16xf32>
    %32 = vector.broadcast %31 : vector<1x16xf32> to vector<8x16xf32>
    %33 = arith.mulf %30, %32 : vector<8x16xf32>
    %cst_18 = arith.constant dense<0.000000e+00> : vector<8xf32>
    %34 = vector.multi_reduction <add>, %33, %cst_18 [1] : vector<8x16xf32> to vector<8xf32>
    %35 = vector.shape_cast %34 : vector<8xf32> to vector<8x1xf32>
    %c0_19 = arith.constant 0 : index
    %36 = memref.load %arg7[%c0_19] : memref<1xf32, #tpu.memory_space<smem>>
    %37 = vector.broadcast %36 : f32 to vector<8x1xf32>
    %38 = arith.addf %35, %37 : vector<8x1xf32>
    %39 = tpu.transpose %38, [1, 0] : vector<8x1xf32> -> vector<1x8xf32>
    %c0_20 = arith.constant 0 : index
    %c0_21 = arith.constant 0 : index
    %40 = vector.load %arg8[%c0_20, %c0_21] : memref<1x8xf32, #tpu.memory_space<vmem>>, vector<1x8xf32>
    tpu.vector_store %arg8[%c0_20, %c0_21], %39 {strides = array<i32>} : memref<1x8xf32, #tpu.memory_space<vmem>>, vector<1x8xf32>,
    return
  }
  func.func @transform_0(%arg0: i32) -> (i32, i32) {
    %c0_i32 = arith.constant 0 : i32
    %c0_i32_0 = arith.constant 0 : i32
    return %arg0, %c0_i32 : i32, i32
  }
  func.func @transform_1(%arg0: i32) -> (i32, i32) {
    %c0_i32 = arith.constant 0 : i32
    %c0_i32_0 = arith.constant 0 : i32
    %c0_i32_1 = arith.constant 0 : i32
    return %c0_i32, %c0_i32_0 : i32, i32
  }
  func.func @transform_2(%arg0: i32) -> (i32, i32) {
    %c0_i32 = arith.constant 0 : i32
    %c0_i32_0 = arith.constant 0 : i32
    %c0_i32_1 = arith.constant 0 : i32
    return %c0_i32, %c0_i32_0 : i32, i32
  }
  func.func @transform_3(%arg0: i32) -> (i32, i32) {
    %c0_i32 = arith.constant 0 : i32
    %c0_i32_0 = arith.constant 0 : i32
    %c0_i32_1 = arith.constant 0 : i32
    return %c0_i32, %c0_i32_0 : i32, i32
  }
  func.func @transform_4(%arg0: i32) -> (i32, i32) {
    %c0_i32 = arith.constant 0 : i32
    %c0_i32_0 = arith.constant 0 : i32
    %c0_i32_1 = arith.constant 0 : i32
    return %c0_i32, %c0_i32_0 : i32, i32
  }
  func.func @transform_5(%arg0: i32) -> (i32, i32) {
    %c0_i32 = arith.constant 0 : i32
    %c0_i32_0 = arith.constant 0 : i32
    %c0_i32_1 = arith.constant 0 : i32
    return %c0_i32, %c0_i32_0 : i32, i32
  }
  func.func @transform_6(%arg0: i32) -> i32 {
    %c0_i32 = arith.constant 0 : i32
    %c0_i32_0 = arith.constant 0 : i32
    return %c0_i32 : i32
  }
  func.func @transform_7(%arg0: i32) -> (i32, i32) {
    %c0_i32 = arith.constant 0 : i32
    %c0_i32_0 = arith.constant 0 : i32
    return %c0_i32, %arg0 : i32, i32
  }
}

module attributes {stable_mosaic.version = 11 : i64} {
  func.func @_fused_rbfnn_kernel(%arg0: i32, %arg1: memref<8x16xf32, #tpu.memory_space<vmem>>, %arg2: memref<16x32xf32, #tpu.memory_space<vmem>>, %arg3: memref<1x32xf32, #tpu.memory_space<vmem>>, %arg4: memref<32x16xf32, #tpu.memory_space<vmem>>, %arg5: memref<1x16xf32, #tpu.memory_space<vmem>>, %arg6: memref<1x16xf32, #tpu.memory_space<vmem>>, %arg7: memref<1xf32, #tpu.memory_space<smem>>, %arg8: memref<1x8xf32, #tpu.memory_space<vmem>>) attributes {dimension_semantics = [#tpu.dimension_semantics<parallel>], iteration_bounds = array<i64: 1>, scalar_prefetch = 0 : i64, scratch_operands = 0 : i64, tpu.core_type = #tpu.core_type<tc>, window_params = [{transform_indices = @transform_0, window_bounds = array<i64: 8, 16>}, {pipeline_mode = #tpu.pipeline_mode<synchronous>, transform_indices = @transform_1, window_bounds = array<i64: 16, 32>}, {pipeline_mode = #tpu.pipeline_mode<synchronous>, transform_indices = @transform_2, window_bounds = array<i64: 1, 32>}, {pipeline_mode = #tpu.pipeline_mode<synchronous>, transform_indices = @transform_3, window_bounds = array<i64: 32, 16>}, {pipeline_mode = #tpu.pipeline_mode<synchronous>, transform_indices = @transform_4, window_bounds = array<i64: 1, 16>}, {pipeline_mode = #tpu.pipeline_mode<synchronous>, transform_indices = @transform_5, window_bounds = array<i64: 1, 16>}, {transform_indices = @transform_6, window_bounds = array<i64: 1>}, {transform_indices = @transform_7, window_bounds = array<i64: 1, 8>}]} {
    %c0 = arith.constant 0 : index
    %c0_0 = arith.constant 0 : index
    %0 = vector.load %arg1[%c0, %c0_0] : memref<8x16xf32, #tpu.memory_space<vmem>>, vector<8x16xf32>
    %c0_1 = arith.constant 0 : index
    %c0_2 = arith.constant 0 : index
    %1 = vector.load %arg2[%c0_1, %c0_2] : memref<16x32xf32, #tpu.memory_space<vmem>>, vector<16x32xf32>
    %c0_3 = arith.constant 0 : index
    %c0_4 = arith.constant 0 : index
    %2 = vector.load %arg3[%c0_3, %c0_4] : memref<1x32xf32, #tpu.memory_space<vmem>>, vector<1x32xf32>
    %3 = arith.mulf %0, %0 : vector<8x16xf32>
    %cst = arith.constant dense<0.000000e+00> : vector<8xf32>
    %4 = vector.multi_reduction <add>, %3, %cst [1] : vector<8x16xf32> to vector<8xf32>
    %5 = vector.shape_cast %4 : vector<8xf32> to vector<8x1xf32>
    %cst_5 = arith.constant dense<0.000000e+00> : vector<8x32xf32>
    %6 = tpu.matmul %0, %1, %cst_5 {dimension_numbers = #tpu.dot_dimension_numbers<[1], [0], [0], [1], [0, 0, 1, 1], [], []>} : vector<8x16xf32>, vector<16x32xf32>, vector<8x32xf32> -> vector<8x32xf32>
    %cst_6 = arith.constant 5.000000e-01 : f32
    %7 = vector.broadcast %cst_6 : f32 to vector<8x1xf32>
    %8 = arith.mulf %7, %5 : vector<8x1xf32>
    %9 = vector.broadcast %8 : vector<8x1xf32> to vector<8x32xf32>
    %10 = arith.subf %6, %9 : vector<8x32xf32>
    %11 = vector.broadcast %2 : vector<1x32xf32> to vector<8x32xf32>
    %12 = arith.addf %10, %11 : vector<8x32xf32>
    %cst_7 = arith.constant 0.000000e+00 : f32
    %13 = vector.broadcast %cst_7 : f32 to vector<8x32xf32>
    %14 = arith.minimumf %12, %13 : vector<8x32xf32>
    %15 = math.exp %14 : vector<8x32xf32>
    %c0_8 = arith.constant 0 : index
    %c0_9 = arith.constant 0 : index
    %16 = vector.load %arg4[%c0_8, %c0_9] : memref<32x16xf32, #tpu.memory_space<vmem>>, vector<32x16xf32>
    %c0_10 = arith.constant 0 : index
    %c0_11 = arith.constant 0 : index
    %17 = vector.load %arg5[%c0_10, %c0_11] : memref<1x16xf32, #tpu.memory_space<vmem>>, vector<1x16xf32>
    %18 = arith.mulf %15, %15 : vector<8x32xf32>
    %cst_12 = arith.constant dense<0.000000e+00> : vector<8xf32>
    %19 = vector.multi_reduction <add>, %18, %cst_12 [1] : vector<8x32xf32> to vector<8xf32>
    %20 = vector.shape_cast %19 : vector<8xf32> to vector<8x1xf32>
    %cst_13 = arith.constant dense<0.000000e+00> : vector<8x16xf32>
    %21 = tpu.matmul %15, %16, %cst_13 {dimension_numbers = #tpu.dot_dimension_numbers<[1], [0], [0], [1], [0, 0, 1, 1], [], []>} : vector<8x32xf32>, vector<32x16xf32>, vector<8x16xf32> -> vector<8x16xf32>
    %cst_14 = arith.constant 1.000000e+00 : f32
    %22 = vector.broadcast %cst_14 : f32 to vector<8x1xf32>
    %23 = arith.mulf %22, %20 : vector<8x1xf32>
    %24 = vector.broadcast %23 : vector<8x1xf32> to vector<8x16xf32>
    %25 = arith.subf %21, %24 : vector<8x16xf32>
    %26 = vector.broadcast %17 : vector<1x16xf32> to vector<8x16xf32>
    %27 = arith.addf %25, %26 : vector<8x16xf32>
    %cst_15 = arith.constant 0.000000e+00 : f32
    %28 = vector.broadcast %cst_15 : f32 to vector<8x16xf32>
    %29 = arith.minimumf %27, %28 : vector<8x16xf32>
    %30 = math.exp %29 : vector<8x16xf32>
    %c0_16 = arith.constant 0 : index
    %c0_17 = arith.constant 0 : index
    %31 = vector.load %arg6[%c0_16, %c0_17] : memref<1x16xf32, #tpu.memory_space<vmem>>, vector<1x16xf32>
    %32 = vector.broadcast %31 : vector<1x16xf32> to vector<8x16xf32>
    %33 = arith.mulf %30, %32 : vector<8x16xf32>
    %cst_18 = arith.constant dense<0.000000e+00> : vector<8xf32>
    %34 = vector.multi_reduction <add>, %33, %cst_18 [1] : vector<8x16xf32> to vector<8xf32>
    %35 = vector.shape_cast %34 : vector<8xf32> to vector<8x1xf32>
    %c0_19 = arith.constant 0 : index
    %36 = memref.load %arg7[%c0_19] : memref<1xf32, #tpu.memory_space<smem>>
    %37 = vector.broadcast %36 : f32 to vector<8x1xf32>
    %38 = arith.addf %35, %37 : vector<8x1xf32>
    %39 = tpu.transpose %38, [1, 0] : vector<8x1xf32> -> vector<1x8xf32>
    %c0_20 = arith.constant 0 : index
    %c0_21 = arith.constant 0 : index
    %40 = vector.load %arg8[%c0_20, %c0_21] : memref<1x8xf32, #tpu.memory_space<vmem>>, vector<1x8xf32>
    tpu.vector_store %arg8[%c0_20, %c0_21], %39 {strides = array<i32>} : memref<1x8xf32, #tpu.memory_space<vmem>>, vector<1x8xf32>,
    return
  }
  func.func @transform_0(%arg0: i32) -> (i32, i32) {
    %c0_i32 = arith.constant 0 : i32
    %c0_i32_0 = arith.constant 0 : i32
    return %arg0, %c0_i32 : i32, i32
  }
  func.func @transform_1(%arg0: i32) -> (i32, i32) {
    %c0_i32 = arith.constant 0 : i32
    %c0_i32_0 = arith.constant 0 : i32
    %c0_i32_1 = arith.constant 0 : i32
    return %c0_i32, %c0_i32_0 : i32, i32
  }
  func.func @transform_2(%arg0: i32) -> (i32, i32) {
    %c0_i32 = arith.constant 0 : i32
    %c0_i32_0 = arith.constant 0 : i32
    %c0_i32_1 = arith.constant 0 : i32
    return %c0_i32, %c0_i32_0 : i32, i32
  }
  func.func @transform_3(%arg0: i32) -> (i32, i32) {
    %c0_i32 = arith.constant 0 : i32
    %c0_i32_0 = arith.constant 0 : i32
    %c0_i32_1 = arith.constant 0 : i32
    return %c0_i32, %c0_i32_0 : i32, i32
  }
  func.func @transform_4(%arg0: i32) -> (i32, i32) {
    %c0_i32 = arith.constant 0 : i32
    %c0_i32_0 = arith.constant 0 : i32
    %c0_i32_1 = arith.constant 0 : i32
    return %c0_i32, %c0_i32_0 : i32, i32
  }
  func.func @transform_5(%arg0: i32) -> (i32, i32) {
    %c0_i32 = arith.constant 0 : i32
    %c0_i32_0 = arith.constant 0 : i32
    %c0_i32_1 = arith.constant 0 : i32
    return %c0_i32, %c0_i32_0 : i32, i32
  }
  func.func @transform_6(%arg0: i32) -> i32 {
    %c0_i32 = arith.constant 0 : i32
    %c0_i32_0 = arith.constant 0 : i32
    return %c0_i32 : i32
  }
  func.func @transform_7(%arg0: i32) -> (i32, i32) {
    %c0_i32 = arith.constant 0 : i32
    %c0_i32_0 = arith.constant 0 : i32
    return %c0_i32, %arg0 : i32, i32
  }
}

module attributes {stable_mosaic.version = 11 : i64} {
  func.func @_fused_rbfnn_kernel(%arg0: i32, %arg1: memref<8x16xf32, #tpu.memory_space<vmem>>, %arg2: memref<16x32xf32, #tpu.memory_space<vmem>>, %arg3: memref<1x32xf32, #tpu.memory_space<vmem>>, %arg4: memref<32x16xf32, #tpu.memory_space<vmem>>, %arg5: memref<1x16xf32, #tpu.memory_space<vmem>>, %arg6: memref<1x16xf32, #tpu.memory_space<vmem>>, %arg7: memref<1xf32, #tpu.memory_space<smem>>, %arg8: memref<8x1xf32, #tpu.memory_space<vmem>>) attributes {dimension_semantics = [#tpu.dimension_semantics<parallel>], iteration_bounds = array<i64: 1>, scalar_prefetch = 0 : i64, scratch_operands = 0 : i64, tpu.core_type = #tpu.core_type<tc>, window_params = [{transform_indices = @transform_0, window_bounds = array<i64: 8, 16>}, {pipeline_mode = #tpu.pipeline_mode<synchronous>, transform_indices = @transform_1, window_bounds = array<i64: 16, 32>}, {pipeline_mode = #tpu.pipeline_mode<synchronous>, transform_indices = @transform_2, window_bounds = array<i64: 1, 32>}, {pipeline_mode = #tpu.pipeline_mode<synchronous>, transform_indices = @transform_3, window_bounds = array<i64: 32, 16>}, {pipeline_mode = #tpu.pipeline_mode<synchronous>, transform_indices = @transform_4, window_bounds = array<i64: 1, 16>}, {pipeline_mode = #tpu.pipeline_mode<synchronous>, transform_indices = @transform_5, window_bounds = array<i64: 1, 16>}, {transform_indices = @transform_6, window_bounds = array<i64: 1>}, {transform_indices = @transform_7, window_bounds = array<i64: 8, 1>}]} {
    %c0 = arith.constant 0 : index
    %c0_0 = arith.constant 0 : index
    %0 = vector.load %arg1[%c0, %c0_0] : memref<8x16xf32, #tpu.memory_space<vmem>>, vector<8x16xf32>
    %c0_1 = arith.constant 0 : index
    %c0_2 = arith.constant 0 : index
    %1 = vector.load %arg2[%c0_1, %c0_2] : memref<16x32xf32, #tpu.memory_space<vmem>>, vector<16x32xf32>
    %c0_3 = arith.constant 0 : index
    %c0_4 = arith.constant 0 : index
    %2 = vector.load %arg3[%c0_3, %c0_4] : memref<1x32xf32, #tpu.memory_space<vmem>>, vector<1x32xf32>
    %3 = arith.mulf %0, %0 : vector<8x16xf32>
    %cst = arith.constant dense<0.000000e+00> : vector<8xf32>
    %4 = vector.multi_reduction <add>, %3, %cst [1] : vector<8x16xf32> to vector<8xf32>
    %5 = vector.shape_cast %4 : vector<8xf32> to vector<8x1xf32>
    %cst_5 = arith.constant dense<0.000000e+00> : vector<8x32xf32>
    %6 = tpu.matmul %0, %1, %cst_5 {dimension_numbers = #tpu.dot_dimension_numbers<[1], [0], [0], [1], [0, 0, 1, 1], [], []>} : vector<8x16xf32>, vector<16x32xf32>, vector<8x32xf32> -> vector<8x32xf32>
    %cst_6 = arith.constant 5.000000e-01 : f32
    %7 = vector.broadcast %cst_6 : f32 to vector<8x1xf32>
    %8 = arith.mulf %7, %5 : vector<8x1xf32>
    %9 = vector.broadcast %8 : vector<8x1xf32> to vector<8x32xf32>
    %10 = arith.subf %6, %9 : vector<8x32xf32>
    %11 = vector.broadcast %2 : vector<1x32xf32> to vector<8x32xf32>
    %12 = arith.addf %10, %11 : vector<8x32xf32>
    %cst_7 = arith.constant 0.000000e+00 : f32
    %13 = vector.broadcast %cst_7 : f32 to vector<8x32xf32>
    %14 = arith.minimumf %12, %13 : vector<8x32xf32>
    %15 = math.exp %14 : vector<8x32xf32>
    %c0_8 = arith.constant 0 : index
    %c0_9 = arith.constant 0 : index
    %16 = vector.load %arg4[%c0_8, %c0_9] : memref<32x16xf32, #tpu.memory_space<vmem>>, vector<32x16xf32>
    %c0_10 = arith.constant 0 : index
    %c0_11 = arith.constant 0 : index
    %17 = vector.load %arg5[%c0_10, %c0_11] : memref<1x16xf32, #tpu.memory_space<vmem>>, vector<1x16xf32>
    %18 = arith.mulf %15, %15 : vector<8x32xf32>
    %cst_12 = arith.constant dense<0.000000e+00> : vector<8xf32>
    %19 = vector.multi_reduction <add>, %18, %cst_12 [1] : vector<8x32xf32> to vector<8xf32>
    %20 = vector.shape_cast %19 : vector<8xf32> to vector<8x1xf32>
    %cst_13 = arith.constant dense<0.000000e+00> : vector<8x16xf32>
    %21 = tpu.matmul %15, %16, %cst_13 {dimension_numbers = #tpu.dot_dimension_numbers<[1], [0], [0], [1], [0, 0, 1, 1], [], []>} : vector<8x32xf32>, vector<32x16xf32>, vector<8x16xf32> -> vector<8x16xf32>
    %cst_14 = arith.constant 1.000000e+00 : f32
    %22 = vector.broadcast %cst_14 : f32 to vector<8x1xf32>
    %23 = arith.mulf %22, %20 : vector<8x1xf32>
    %24 = vector.broadcast %23 : vector<8x1xf32> to vector<8x16xf32>
    %25 = arith.subf %21, %24 : vector<8x16xf32>
    %26 = vector.broadcast %17 : vector<1x16xf32> to vector<8x16xf32>
    %27 = arith.addf %25, %26 : vector<8x16xf32>
    %cst_15 = arith.constant 0.000000e+00 : f32
    %28 = vector.broadcast %cst_15 : f32 to vector<8x16xf32>
    %29 = arith.minimumf %27, %28 : vector<8x16xf32>
    %30 = math.exp %29 : vector<8x16xf32>
    %c0_16 = arith.constant 0 : index
    %c0_17 = arith.constant 0 : index
    %31 = vector.load %arg6[%c0_16, %c0_17] : memref<1x16xf32, #tpu.memory_space<vmem>>, vector<1x16xf32>
    %32 = vector.broadcast %31 : vector<1x16xf32> to vector<8x16xf32>
    %33 = arith.mulf %30, %32 : vector<8x16xf32>
    %cst_18 = arith.constant dense<0.000000e+00> : vector<8xf32>
    %34 = vector.multi_reduction <add>, %33, %cst_18 [1] : vector<8x16xf32> to vector<8xf32>
    %35 = vector.shape_cast %34 : vector<8xf32> to vector<8x1xf32>
    %c0_19 = arith.constant 0 : index
    %36 = memref.load %arg7[%c0_19] : memref<1xf32, #tpu.memory_space<smem>>
    %37 = vector.broadcast %36 : f32 to vector<8x1xf32>
    %38 = arith.addf %35, %37 : vector<8x1xf32>
    %c0_20 = arith.constant 0 : index
    %c0_21 = arith.constant 0 : index
    %39 = vector.load %arg8[%c0_20, %c0_21] : memref<8x1xf32, #tpu.memory_space<vmem>>, vector<8x1xf32>
    tpu.vector_store %arg8[%c0_20, %c0_21], %38 {strides = array<i32>} : memref<8x1xf32, #tpu.memory_space<vmem>>, vector<8x1xf32>,
    return
  }
  func.func @transform_0(%arg0: i32) -> (i32, i32) {
    %c0_i32 = arith.constant 0 : i32
    %c0_i32_0 = arith.constant 0 : i32
    return %arg0, %c0_i32 : i32, i32
  }
  func.func @transform_1(%arg0: i32) -> (i32, i32) {
    %c0_i32 = arith.constant 0 : i32
    %c0_i32_0 = arith.constant 0 : i32
    %c0_i32_1 = arith.constant 0 : i32
    return %c0_i32, %c0_i32_0 : i32, i32
  }
  func.func @transform_2(%arg0: i32) -> (i32, i32) {
    %c0_i32 = arith.constant 0 : i32
    %c0_i32_0 = arith.constant 0 : i32
    %c0_i32_1 = arith.constant 0 : i32
    return %c0_i32, %c0_i32_0 : i32, i32
  }
  func.func @transform_3(%arg0: i32) -> (i32, i32) {
    %c0_i32 = arith.constant 0 : i32
    %c0_i32_0 = arith.constant 0 : i32
    %c0_i32_1 = arith.constant 0 : i32
    return %c0_i32, %c0_i32_0 : i32, i32
  }
  func.func @transform_4(%arg0: i32) -> (i32, i32) {
    %c0_i32 = arith.constant 0 : i32
    %c0_i32_0 = arith.constant 0 : i32
    %c0_i32_1 = arith.constant 0 : i32
    return %c0_i32, %c0_i32_0 : i32, i32
  }
  func.func @transform_5(%arg0: i32) -> (i32, i32) {
    %c0_i32 = arith.constant 0 : i32
    %c0_i32_0 = arith.constant 0 : i32
    %c0_i32_1 = arith.constant 0 : i32
    return %c0_i32, %c0_i32_0 : i32, i32
  }
  func.func @transform_6(%arg0: i32) -> i32 {
    %c0_i32 = arith.constant 0 : i32
    %c0_i32_0 = arith.constant 0 : i32
    return %c0_i32 : i32
  }
  func.func @transform_7(%arg0: i32) -> (i32, i32) {
    %c0_i32 = arith.constant 0 : i32
    %c0_i32_0 = arith.constant 0 : i32
    return %arg0, %c0_i32 : i32, i32
  }
}

</mosaic_0001>

<llo_original>
// kernel: tpu_custom_call.1
$region0: #{tpu_custom_call.1}
  #allocation0 [shape = 'u32[]', space=smem, size = 0x4, offset = 0x4, fixed_abs, tag = 'smem constant byte address 0x4 - core index']
  #allocation1 [shape = 'u32[144,128]{1,0:T(1,128)}', space=vmem, size = 0x12000, scoped, tag = 'internal scratch']
  #allocation2 [shape = 'f32[1]{0:T(128)S(6)}', space=smem, size = 0x200, scoped, tag = 'scoped memory for tpu_custom_call.1']
  %s0 = inlined_call_operand.vmem [shape: f32[8,16], index: 0, kind: input, shape index: {}]
  %s1 = inlined_call_operand.vmem [shape: f32[16,32], index: 1, kind: input, shape index: {}]
  %s2 = inlined_call_operand.vmem [shape: f32[1,32], index: 2, kind: input, shape index: {}]
  %s3 = inlined_call_operand.vmem [shape: f32[32,16], index: 3, kind: input, shape index: {}]
  %s4 = inlined_call_operand.vmem [shape: f32[1,16], index: 4, kind: input, shape index: {}]
  %s5 = inlined_call_operand.vmem [shape: f32[1,16], index: 5, kind: input, shape index: {}]
  %s6 = inlined_call_operand.<no memory space> [shape: f32[1], index: 6, kind: input, shape index: {}]
  %s7 = inlined_call_operand.hbm [shape: f32[1,8], index: 7, kind: output, shape index: {}]
  %s8 = sld [smem:[#allocation0]]
  $region38: #{tpu_custom_call.1} parent=0
    _
  %s10 = ssub.s32 1, %s8
  %s11 = scalar_select 0, %s10, %s8
  %12 = sst [smem:[#allocation2]] %s6
  $region1: #{tpu_custom_call.1} parent=0
    #allocation3 [shape = 'u8[512]{0}', space=vmem, size = 0x400, scoped, tag = 'output window, operand 0, single buffered']
    #allocation4 [shape = 's32[1]{0}', space=sflag, size = 0x4, scoped, tag = 'scoped memory for tpu_custom_call.1']
    %13 = vsyncpa [#allocation4], 0
    // Predicated region
    $region2: #{tpu_custom_call.1} parent=1 // pred_check
      _
    $region3: #{tpu_custom_call.1} parent=1 // pred_check_branch
      %15 = sbr.rel (0) target = $region5
    $region4: #{tpu_custom_call.1} parent=1 // pred_region
      _
    $region5: #{tpu_custom_call.1} parent=1 // pred_fallthru
      _
    // Predicated region
    $region6: #{tpu_custom_call.1} parent=1 // pred_check
      _
    $region7: #{tpu_custom_call.1} parent=1 // pred_check_branch
      %17 = sbr.rel (0) target = $region9
    $region8: #{tpu_custom_call.1} parent=1 // pred_region
      _
    $region9: #{tpu_custom_call.1} parent=1 // pred_fallthru
      _
    // Predicated region
    $region10: #{tpu_custom_call.1} parent=1 // pred_check
      _
    $region11: #{tpu_custom_call.1} parent=1 // pred_check_branch
      %19 = sbr.rel (0) target = $region13
    $region12: #{tpu_custom_call.1} parent=1 // pred_region
      _
    $region13: #{tpu_custom_call.1} parent=1 // pred_fallthru
      _
    // Predicated region
    $region14: #{tpu_custom_call.1} parent=1 // pred_check
      _
    $region15: #{tpu_custom_call.1} parent=1 // pred_check_branch
      %21 = sbr.rel (0) target = $region17
    $region16: #{tpu_custom_call.1} parent=1 // pred_region
      _
    $region17: #{tpu_custom_call.1} parent=1 // pred_fallthru
      _
    // Predicated region
    $region18: #{tpu_custom_call.1} parent=1 // pred_check
      _
    $region19: #{tpu_custom_call.1} parent=1 // pred_check_branch
      %23 = sbr.rel (0) target = $region21
    $region20: #{tpu_custom_call.1} parent=1 // pred_region
      _
    $region21: #{tpu_custom_call.1} parent=1 // pred_fallthru
      _
    // Predicated region
    $region22: #{tpu_custom_call.1} parent=1 // pred_check
      _
    $region23: #{tpu_custom_call.1} parent=1 // pred_check_branch
      %25 = sbr.rel (0) target = $region25
    $region24: #{tpu_custom_call.1} parent=1 // pred_region
      _
    $region25: #{tpu_custom_call.1} parent=1 // pred_fallthru
      _
    // Predicated region
    $region26: #{tpu_custom_call.1} parent=1 // pred_check
      _
    $region27: #{tpu_custom_call.1} parent=1 // pred_check_branch
      %27 = sbr.rel (0) target = $region29
    $region28: #{tpu_custom_call.1} parent=1 // pred_region
      _
    $region29: #{tpu_custom_call.1} parent=1 // pred_fallthru
      _
    %v28 = vld [vmem:[%s0] sm:$0xff]
    %v29 = vld [vmem:[%s1] sm:$0xff]
    %v30 = vld [vmem:[%s1 + $0x8] sm:$0xff]
    %v31 = vld [vmem:[%s2] sm:$0x1]
    %v32 = vmul.f32 %v28, %v28
    %vm33 = vcmask 130048
    %v34 = vsel %vm33, %v32, 0.0
    %35 = vadd.xlane.f32.xlu0 %v34
    %v36 = vpop.xlane.xlu0 %35
    %v38 = vsel %vm33, %v28, 0
    %40 = vmatprep.subr.mxu0 0.0
    %41 = vmatpush1.msra.mxu0 0.0
    %42 = vmatprep.subr.mxu0 0.0
    %43 = vmatpush1.msra.mxu0 0.0
    %44 = vmatprep.subr.mxu0 0.0
    %45 = vmatpush1.msra.mxu0 0.0
    %46 = vmatprep.subr.mxu0 0.0
    %47 = vmatpush1.msra.mxu0 0.0
    %48 = vmatprep.subr.mxu0 0.0
    %49 = vmatpush1.msra.mxu0 0.0
    %50 = vmatprep.subr.mxu0 0.0
    %51 = vmatpush1.msra.mxu0 0.0
    %52 = vmatprep.subr.mxu0 0.0
    %53 = vmatpush1.msra.mxu0 0.0
    %54 = vmatprep.subr.mxu0 0.0
    %55 = vmatpush1.msra.mxu0 0.0
    %56 = vmatprep.subr.mxu0 0.0
    %57 = vmatpush1.msra.mxu0 0.0
    %58 = vmatprep.subr.mxu0 0.0
    %59 = vmatpush1.msra.mxu0 0.0
    %60 = vmatprep.subr.mxu0 0.0
    %61 = vmatpush1.msra.mxu0 0.0
    %62 = vmatprep.subr.mxu0 0.0
    %63 = vmatpush1.msra.mxu0 0.0
    %64 = vmatprep.subr.mxu0 0.0
    %65 = vmatpush1.msra.mxu0 0.0
    %66 = vmatprep.subr.mxu0 0.0
    %67 = vmatpush1.msra.mxu0 0.0
    %68 = vmatprep.subr.mxu0 0.0
    %69 = vmatpush1.msra.mxu0 %v30
    %70 = vmatprep.subr.mxu0 0.0
    %71 = vmatpush1.msra.mxu0 %v29
    %72 = vmatprep.subr.mxu0 0.0
    %73 = vmatpush2.msra.mxu0 0.0
    %74 = vmatprep.subr.mxu0 0.0
    %75 = vmatpush2.msra.mxu0 0.0
    %76 = vmatprep.subr.mxu0 0.0
    %77 = vmatpush2.msra.mxu0 0.0
    %78 = vmatprep.subr.mxu0 0.0
    %79 = vmatpush2.msra.mxu0 0.0
    %80 = vmatprep.subr.mxu0 0.0
    %81 = vmatpush2.msra.mxu0 0.0
    %82 = vmatprep.subr.mxu0 0.0
    %83 = vmatpush2.msra.mxu0 0.0
    %84 = vmatprep.subr.mxu0 0.0
    %85 = vmatpush2.msra.mxu0 0.0
    %86 = vmatprep.subr.mxu0 0.0
    %87 = vmatpush2.msra.mxu0 0.0
    %88 = vmatprep.subr.mxu0 0.0
    %89 = vmatpush2.msra.mxu0 0.0
    %90 = vmatprep.subr.mxu0 0.0
    %91 = vmatpush2.msra.mxu0 0.0
    %92 = vmatprep.subr.mxu0 0.0
    %93 = vmatpush2.msra.mxu0 0.0
    %94 = vmatprep.subr.mxu0 0.0
    %95 = vmatpush2.msra.mxu0 0.0
    %96 = vmatprep.subr.mxu0 0.0
    %97 = vmatpush2.msra.mxu0 0.0
    %98 = vmatprep.subr.mxu0 0.0
    %99 = vmatpush2.msra.mxu0 0.0
    %100 = vmatprep.subr.mxu0 0.0
    %101 = vmatpush2.msra.mxu0 0.0
    %102 = vmatprep.subr.mxu0 0.0
    %103 = vmatpush2.msra.mxu0 0.0
    %104 = vmatprep.mubr.f32.mxu0 0.0
    %105 = vmatmul.mubr.f32.gmra.mxu0 %v38
    %v106 = vpop.f32.mrf.mxu0
    %v107 = vadd.f32 0.0, %v106
    %v108 = vpop.f32.mrf.mxu0
    %109 = vdwg.mxu0
    %v110 = vmul.f32 %v36, 0.5
    %v111 = vsub.f32 %v107, %v110
    %v113 = vlaneseq
    %v114 = vshrl.u32 %v113, 7
    %v115 = vsub.s32 0, %v114
    %v116 = vrot.slane %v31, %v115
    %v118 = vadd.f32 %v111, %v116
    %v119 = vmin.f32 %v118, 0.0
    %v120 = vmul.f32 %v119, 1.442695
    %v121 = vpow.pop %v120
    %v122 = vld [vmem:[%s3] sm:$0xff]
    %v123 = vld [vmem:[%s3 + $0x8] sm:$0xff]
    %v124 = vld [vmem:[%s3 + $0x10] sm:$0xff]
    %v125 = vld [vmem:[%s3 + $0x18] sm:$0xff]
    %v126 = vld [vmem:[%s4] sm:$0x1]
    %v127 = vmul.f32 %v121, %v121
    %vm128 = vcmask 261120
    %v129 = vsel %vm128, %v127, 0.0
    %130 = vadd.xlane.f32.xlu0 %v129
    %v131 = vpop.xlane.xlu0 %130
    %v133 = vsel %vm128, %v121, 0
    %135 = vmatprep.subr.mxu0 0.0
    %136 = vmatpush1.msra.mxu0 0.0
    %137 = vmatprep.subr.mxu0 0.0
    %138 = vmatpush1.msra.mxu0 0.0
    %139 = vmatprep.subr.mxu0 0.0
    %140 = vmatpush1.msra.mxu0 0.0
    %141 = vmatprep.subr.mxu0 0.0
    %142 = vmatpush1.msra.mxu0 0.0
    %143 = vmatprep.subr.mxu0 0.0
    %144 = vmatpush1.msra.mxu0 0.0
    %145 = vmatprep.subr.mxu0 0.0
    %146 = vmatpush1.msra.mxu0 0.0
    %147 = vmatprep.subr.mxu0 0.0
    %148 = vmatpush1.msra.mxu0 0.0
    %149 = vmatprep.subr.mxu0 0.0
    %150 = vmatpush1.msra.mxu0 0.0
    %151 = vmatprep.subr.mxu0 0.0
    %152 = vmatpush1.msra.mxu0 0.0
    %153 = vmatprep.subr.mxu0 0.0
    %154 = vmatpush1.msra.mxu0 0.0
    %155 = vmatprep.subr.mxu0 0.0
    %156 = vmatpush1.msra.mxu0 0.0
    %157 = vmatprep.subr.mxu0 0.0
    %158 = vmatpush1.msra.mxu0 0.0
    %159 = vmatprep.subr.mxu0 0.0
    %160 = vmatpush1.msra.mxu0 %v125
    %161 = vmatprep.subr.mxu0 0.0
    %162 = vmatpush1.msra.mxu0 %v124
    %163 = vmatprep.subr.mxu0 0.0
    %164 = vmatpush1.msra.mxu0 %v123
    %165 = vmatprep.subr.mxu0 0.0
    %166 = vmatpush1.msra.mxu0 %v122
    %167 = vmatprep.subr.mxu0 0.0
    %168 = vmatpush2.msra.mxu0 0.0
    %169 = vmatprep.subr.mxu0 0.0
    %170 = vmatpush2.msra.mxu0 0.0
    %171 = vmatprep.subr.mxu0 0.0
    %172 = vmatpush2.msra.mxu0 0.0
    %173 = vmatprep.subr.mxu0 0.0
    %174 = vmatpush2.msra.mxu0 0.0
    %175 = vmatprep.subr.mxu0 0.0
    %176 = vmatpush2.msra.mxu0 0.0
    %177 = vmatprep.subr.mxu0 0.0
    %178 = vmatpush2.msra.mxu0 0.0
    %179 = vmatprep.subr.mxu0 0.0
    %180 = vmatpush2.msra.mxu0 0.0
    %181 = vmatprep.subr.mxu0 0.0
    %182 = vmatpush2.msra.mxu0 0.0
    %183 = vmatprep.subr.mxu0 0.0
    %184 = vmatpush2.msra.mxu0 0.0
    %185 = vmatprep.subr.mxu0 0.0
    %186 = vmatpush2.msra.mxu0 0.0
    %187 = vmatprep.subr.mxu0 0.0
    %188 = vmatpush2.msra.mxu0 0.0
    %189 = vmatprep.subr.mxu0 0.0
    %190 = vmatpush2.msra.mxu0 0.0
    %191 = vmatprep.subr.mxu0 0.0
    %192 = vmatpush2.msra.mxu0 0.0
    %193 = vmatprep.subr.mxu0 0.0
    %194 = vmatpush2.msra.mxu0 0.0
    %195 = vmatprep.subr.mxu0 0.0
    %196 = vmatpush2.msra.mxu0 0.0
    %197 = vmatprep.subr.mxu0 0.0
    %198 = vmatpush2.msra.mxu0 0.0
    %199 = vmatprep.mubr.f32.mxu0 0.0
    %200 = vmatmul.mubr.f32.gmra.mxu0 %v133
    %v201 = vpop.f32.mrf.mxu0
    %v202 = vadd.f32 0.0, %v201
    %v203 = vpop.f32.mrf.mxu0
    %204 = vdwg.mxu0
    %v205 = vsub.f32 %v202, %v131
    %v207 = vlaneseq
    %v208 = vshrl.u32 %v207, 7
    %v209 = vsub.s32 0, %v208
    %v210 = vrot.slane %v126, %v209
    %v212 = vadd.f32 %v205, %v210
    %v213 = vmin.f32 %v212, 0.0
    %v214 = vmul.f32 %v213, 1.442695
    %v215 = vpow.pop %v214
    %v216 = vld [vmem:[%s5] sm:$0x1]
    %v218 = vlaneseq
    %v219 = vshrl.u32 %v218, 7
    %v220 = vsub.s32 0, %v219
    %v221 = vrot.slane %v216, %v220
    %v223 = vmul.f32 %v215, %v221
    %v224 = vsel %vm33, %v223, 0.0
    %225 = vadd.xlane.f32.xlu0 %v224
    %v226 = vpop.xlane.xlu0 %225
    %s227 = sld [smem:[#allocation2]]
    %v228 = vstv %s227
    %v229 = vadd.f32 %v226, %v228
    %230 = vxpose.xlu0.b32.start [1/16] %v229, 128
    %231 = vxpose.xlu0.b32.cont [2/16] 0.0, 128
    %232 = vxpose.xlu0.b32.cont [3/16] 0.0, 128
    %233 = vxpose.xlu0.b32.cont [4/16] 0.0, 128
    %234 = vxpose.xlu0.b32.cont [5/16] 0.0, 128
    %235 = vxpose.xlu0.b32.cont [6/16] 0.0, 128
    %236 = vxpose.xlu0.b32.cont [7/16] 0.0, 128
    %237 = vxpose.xlu0.b32.cont [8/16] 0.0, 128
    %238 = vxpose.xlu0.b32.cont [9/16] 0.0, 128
    %239 = vxpose.xlu0.b32.cont [10/16] 0.0, 128
    %240 = vxpose.xlu0.b32.cont [11/16] 0.0, 128
    %241 = vxpose.xlu0.b32.cont [12/16] 0.0, 128
    %242 = vxpose.xlu0.b32.cont [13/16] 0.0, 128
    %243 = vxpose.xlu0.b32.cont [14/16] 0.0, 128
    %244 = vxpose.xlu0.b32.cont [15/16] 0.0, 128
    %245 = vxpose.xlu0.b32.end [16/16] 0.0, 128
    %v246 = vpop.trf.xlu0
    %v247 = vpop.trf.xlu0
    %v248 = vpop.trf.xlu0
    %v249 = vpop.trf.xlu0
    %v250 = vpop.trf.xlu0
    %v251 = vpop.trf.xlu0
    %v252 = vpop.trf.xlu0
    %v253 = vpop.trf.xlu0
    %v254 = vpop.trf.xlu0
    %v255 = vpop.trf.xlu0
    %v256 = vpop.trf.xlu0
    %v257 = vpop.trf.xlu0
    %v258 = vpop.trf.xlu0
    %v259 = vpop.trf.xlu0
    %v260 = vpop.trf.xlu0
    %v261 = vpop.trf.xlu0
    %vm262 = vcmask 57344
    %263 = vst.msk [vmem:[#allocation3] sm:$0x1] %vm262, %v246
    // Predicated region
    $region30: #{tpu_custom_call.1} parent=1 // pred_check
      _
    $region31: #{tpu_custom_call.1} parent=1 // pred_check_branch
      %265 = sbr.rel (0) target = $region33
    $region32: #{tpu_custom_call.1} parent=1 // pred_region
      %s267 = ssub.s32 16, 16
      %268 = vsyncadd [#allocation4], %s267
      %s270 = sshll.u32 [#allocation3], 4
      %s271 = int_to_ptr.vmem [resolvable:$true] %s270
      %273 = dma.vmem_to_hbm [thread:$0]  %s271, 16, %s7, [#allocation4]
    $region33: #{tpu_custom_call.1} parent=1 // pred_fallthru
      _
    // Predicated region
    $region34: #{tpu_custom_call.1} parent=1 // pred_check
      _
    $region35: #{tpu_custom_call.1} parent=1 // pred_check_branch
      %275 = sbr.rel (0) target = $region37
    $region36: #{tpu_custom_call.1} parent=1 // pred_region
      %276 = dma.done [#allocation4], 16
    $region37: #{tpu_custom_call.1} parent=1 // pred_fallthru
      _
    %277 = vsyncpa [#allocation4], 1

// kernel: tpu_custom_call.1
$region0: #{tpu_custom_call.1}
  #allocation0 [shape = 'u32[]', space=smem, size = 0x4, offset = 0x4, fixed_abs, tag = 'smem constant byte address 0x4 - core index']
  #allocation1 [shape = 'u32[144,128]{1,0:T(1,128)}', space=vmem, size = 0x12000, scoped, tag = 'internal scratch']
  #allocation2 [shape = 'f32[1]{0:T(128)S(6)}', space=smem, size = 0x200, scoped, tag = 'scoped memory for tpu_custom_call.1']
  %s0 = inlined_call_operand.vmem [shape: f32[8,16], index: 0, kind: input, shape index: {}]
  %s1 = inlined_call_operand.vmem [shape: f32[16,32], index: 1, kind: input, shape index: {}]
  %s2 = inlined_call_operand.vmem [shape: f32[1,32], index: 2, kind: input, shape index: {}]
  %s3 = inlined_call_operand.vmem [shape: f32[32,16], index: 3, kind: input, shape index: {}]
  %s4 = inlined_call_operand.vmem [shape: f32[1,16], index: 4, kind: input, shape index: {}]
  %s5 = inlined_call_operand.vmem [shape: f32[1,16], index: 5, kind: input, shape index: {}]
  %s6 = inlined_call_operand.<no memory space> [shape: f32[1], index: 6, kind: input, shape index: {}]
  %s7 = inlined_call_operand.hbm [shape: f32[1,8], index: 7, kind: output, shape index: {}]
  %s8 = sld [smem:[#allocation0]]
  $region38: #{tpu_custom_call.1} parent=0
    _
  %s10 = ssub.s32 1, %s8
  %s11 = scalar_select 0, %s10, %s8
  %12 = sst [smem:[#allocation2]] %s6
  $region1: #{tpu_custom_call.1} parent=0
    #allocation3 [shape = 'u8[512]{0}', space=vmem, size = 0x400, scoped, tag = 'output window, operand 0, single buffered']
    #allocation4 [shape = 's32[1]{0}', space=sflag, size = 0x4, scoped, tag = 'scoped memory for tpu_custom_call.1']
    %13 = vsyncpa [#allocation4], 0
    // Predicated region
    $region2: #{tpu_custom_call.1} parent=1 // pred_check
      _
    $region3: #{tpu_custom_call.1} parent=1 // pred_check_branch
      %15 = sbr.rel (0) target = $region5
    $region4: #{tpu_custom_call.1} parent=1 // pred_region
      _
    $region5: #{tpu_custom_call.1} parent=1 // pred_fallthru
      _
    // Predicated region
    $region6: #{tpu_custom_call.1} parent=1 // pred_check
      _
    $region7: #{tpu_custom_call.1} parent=1 // pred_check_branch
      %17 = sbr.rel (0) target = $region9
    $region8: #{tpu_custom_call.1} parent=1 // pred_region
      _
    $region9: #{tpu_custom_call.1} parent=1 // pred_fallthru
      _
    // Predicated region
    $region10: #{tpu_custom_call.1} parent=1 // pred_check
      _
    $region11: #{tpu_custom_call.1} parent=1 // pred_check_branch
      %19 = sbr.rel (0) target = $region13
    $region12: #{tpu_custom_call.1} parent=1 // pred_region
      _
    $region13: #{tpu_custom_call.1} parent=1 // pred_fallthru
      _
    // Predicated region
    $region14: #{tpu_custom_call.1} parent=1 // pred_check
      _
    $region15: #{tpu_custom_call.1} parent=1 // pred_check_branch
      %21 = sbr.rel (0) target = $region17
    $region16: #{tpu_custom_call.1} parent=1 // pred_region
      _
    $region17: #{tpu_custom_call.1} parent=1 // pred_fallthru
      _
    // Predicated region
    $region18: #{tpu_custom_call.1} parent=1 // pred_check
      _
    $region19: #{tpu_custom_call.1} parent=1 // pred_check_branch
      %23 = sbr.rel (0) target = $region21
    $region20: #{tpu_custom_call.1} parent=1 // pred_region
      _
    $region21: #{tpu_custom_call.1} parent=1 // pred_fallthru
      _
    // Predicated region
    $region22: #{tpu_custom_call.1} parent=1 // pred_check
      _
    $region23: #{tpu_custom_call.1} parent=1 // pred_check_branch
      %25 = sbr.rel (0) target = $region25
    $region24: #{tpu_custom_call.1} parent=1 // pred_region
      _
    $region25: #{tpu_custom_call.1} parent=1 // pred_fallthru
      _
    // Predicated region
    $region26: #{tpu_custom_call.1} parent=1 // pred_check
      _
    $region27: #{tpu_custom_call.1} parent=1 // pred_check_branch
      %27 = sbr.rel (0) target = $region29
    $region28: #{tpu_custom_call.1} parent=1 // pred_region
      _
    $region29: #{tpu_custom_call.1} parent=1 // pred_fallthru
      _
    %v28 = vld [vmem:[%s0] sm:$0xff]
    %v29 = vld [vmem:[%s1] sm:$0xff]
    %v30 = vld [vmem:[%s1 + $0x8] sm:$0xff]
    %v31 = vld [vmem:[%s2] sm:$0x1]
    %v32 = vmul.f32 %v28, %v28
    %vm33 = vcmask 130048
    %v34 = vsel %vm33, %v32, 0.0
    %35 = vadd.xlane.f32.xlu0 %v34
    %v36 = vpop.xlane.xlu0 %35
    %v38 = vsel %vm33, %v28, 0
    %40 = vmatprep.subr.mxu0 0.0
    %41 = vmatpush1.msra.mxu0 0.0
    %42 = vmatprep.subr.mxu0 0.0
    %43 = vmatpush1.msra.mxu0 0.0
    %44 = vmatprep.subr.mxu0 0.0
    %45 = vmatpush1.msra.mxu0 0.0
    %46 = vmatprep.subr.mxu0 0.0
    %47 = vmatpush1.msra.mxu0 0.0
    %48 = vmatprep.subr.mxu0 0.0
    %49 = vmatpush1.msra.mxu0 0.0
    %50 = vmatprep.subr.mxu0 0.0
    %51 = vmatpush1.msra.mxu0 0.0
    %52 = vmatprep.subr.mxu0 0.0
    %53 = vmatpush1.msra.mxu0 0.0
    %54 = vmatprep.subr.mxu0 0.0
    %55 = vmatpush1.msra.mxu0 0.0
    %56 = vmatprep.subr.mxu0 0.0
    %57 = vmatpush1.msra.mxu0 0.0
    %58 = vmatprep.subr.mxu0 0.0
    %59 = vmatpush1.msra.mxu0 0.0
    %60 = vmatprep.subr.mxu0 0.0
    %61 = vmatpush1.msra.mxu0 0.0
    %62 = vmatprep.subr.mxu0 0.0
    %63 = vmatpush1.msra.mxu0 0.0
    %64 = vmatprep.subr.mxu0 0.0
    %65 = vmatpush1.msra.mxu0 0.0
    %66 = vmatprep.subr.mxu0 0.0
    %67 = vmatpush1.msra.mxu0 0.0
    %68 = vmatprep.subr.mxu0 0.0
    %69 = vmatpush1.msra.mxu0 %v30
    %70 = vmatprep.subr.mxu0 0.0
    %71 = vmatpush1.msra.mxu0 %v29
    %72 = vmatprep.subr.mxu0 0.0
    %73 = vmatpush2.msra.mxu0 0.0
    %74 = vmatprep.subr.mxu0 0.0
    %75 = vmatpush2.msra.mxu0 0.0
    %76 = vmatprep.subr.mxu0 0.0
    %77 = vmatpush2.msra.mxu0 0.0
    %78 = vmatprep.subr.mxu0 0.0
    %79 = vmatpush2.msra.mxu0 0.0
    %80 = vmatprep.subr.mxu0 0.0
    %81 = vmatpush2.msra.mxu0 0.0
    %82 = vmatprep.subr.mxu0 0.0
    %83 = vmatpush2.msra.mxu0 0.0
    %84 = vmatprep.subr.mxu0 0.0
    %85 = vmatpush2.msra.mxu0 0.0
    %86 = vmatprep.subr.mxu0 0.0
    %87 = vmatpush2.msra.mxu0 0.0
    %88 = vmatprep.subr.mxu0 0.0
    %89 = vmatpush2.msra.mxu0 0.0
    %90 = vmatprep.subr.mxu0 0.0
    %91 = vmatpush2.msra.mxu0 0.0
    %92 = vmatprep.subr.mxu0 0.0
    %93 = vmatpush2.msra.mxu0 0.0
    %94 = vmatprep.subr.mxu0 0.0
    %95 = vmatpush2.msra.mxu0 0.0
    %96 = vmatprep.subr.mxu0 0.0
    %97 = vmatpush2.msra.mxu0 0.0
    %98 = vmatprep.subr.mxu0 0.0
    %99 = vmatpush2.msra.mxu0 0.0
    %100 = vmatprep.subr.mxu0 0.0
    %101 = vmatpush2.msra.mxu0 0.0
    %102 = vmatprep.subr.mxu0 0.0
    %103 = vmatpush2.msra.mxu0 0.0
    %104 = vmatprep.mubr.f32.mxu0 0.0
    %105 = vmatmul.mubr.f32.gmra.mxu0 %v38
    %v106 = vpop.f32.mrf.mxu0
    %v107 = vadd.f32 0.0, %v106
    %v108 = vpop.f32.mrf.mxu0
    %109 = vdwg.mxu0
    %v110 = vmul.f32 %v36, 0.5
    %v111 = vsub.f32 %v107, %v110
    %v113 = vlaneseq
    %v114 = vshrl.u32 %v113, 7
    %v115 = vsub.s32 0, %v114
    %v116 = vrot.slane %v31, %v115
    %v118 = vadd.f32 %v111, %v116
    %v119 = vmin.f32 %v118, 0.0
    %v120 = vmul.f32 %v119, 1.442695
    %v121 = vpow.pop %v120
    %v122 = vld [vmem:[%s3] sm:$0xff]
    %v123 = vld [vmem:[%s3 + $0x8] sm:$0xff]
    %v124 = vld [vmem:[%s3 + $0x10] sm:$0xff]
    %v125 = vld [vmem:[%s3 + $0x18] sm:$0xff]
    %v126 = vld [vmem:[%s4] sm:$0x1]
    %v127 = vmul.f32 %v121, %v121
    %vm128 = vcmask 261120
    %v129 = vsel %vm128, %v127, 0.0
    %130 = vadd.xlane.f32.xlu0 %v129
    %v131 = vpop.xlane.xlu0 %130
    %v133 = vsel %vm128, %v121, 0
    %135 = vmatprep.subr.mxu0 0.0
    %136 = vmatpush1.msra.mxu0 0.0
    %137 = vmatprep.subr.mxu0 0.0
    %138 = vmatpush1.msra.mxu0 0.0
    %139 = vmatprep.subr.mxu0 0.0
    %140 = vmatpush1.msra.mxu0 0.0
    %141 = vmatprep.subr.mxu0 0.0
    %142 = vmatpush1.msra.mxu0 0.0
    %143 = vmatprep.subr.mxu0 0.0
    %144 = vmatpush1.msra.mxu0 0.0
    %145 = vmatprep.subr.mxu0 0.0
    %146 = vmatpush1.msra.mxu0 0.0
    %147 = vmatprep.subr.mxu0 0.0
    %148 = vmatpush1.msra.mxu0 0.0
    %149 = vmatprep.subr.mxu0 0.0
    %150 = vmatpush1.msra.mxu0 0.0
    %151 = vmatprep.subr.mxu0 0.0
    %152 = vmatpush1.msra.mxu0 0.0
    %153 = vmatprep.subr.mxu0 0.0
    %154 = vmatpush1.msra.mxu0 0.0
    %155 = vmatprep.subr.mxu0 0.0
    %156 = vmatpush1.msra.mxu0 0.0
    %157 = vmatprep.subr.mxu0 0.0
    %158 = vmatpush1.msra.mxu0 0.0
    %159 = vmatprep.subr.mxu0 0.0
    %160 = vmatpush1.msra.mxu0 %v125
    %161 = vmatprep.subr.mxu0 0.0
    %162 = vmatpush1.msra.mxu0 %v124
    %163 = vmatprep.subr.mxu0 0.0
    %164 = vmatpush1.msra.mxu0 %v123
    %165 = vmatprep.subr.mxu0 0.0
    %166 = vmatpush1.msra.mxu0 %v122
    %167 = vmatprep.subr.mxu0 0.0
    %168 = vmatpush2.msra.mxu0 0.0
    %169 = vmatprep.subr.mxu0 0.0
    %170 = vmatpush2.msra.mxu0 0.0
    %171 = vmatprep.subr.mxu0 0.0
    %172 = vmatpush2.msra.mxu0 0.0
    %173 = vmatprep.subr.mxu0 0.0
    %174 = vmatpush2.msra.mxu0 0.0
    %175 = vmatprep.subr.mxu0 0.0
    %176 = vmatpush2.msra.mxu0 0.0
    %177 = vmatprep.subr.mxu0 0.0
    %178 = vmatpush2.msra.mxu0 0.0
    %179 = vmatprep.subr.mxu0 0.0
    %180 = vmatpush2.msra.mxu0 0.0
    %181 = vmatprep.subr.mxu0 0.0
    %182 = vmatpush2.msra.mxu0 0.0
    %183 = vmatprep.subr.mxu0 0.0
    %184 = vmatpush2.msra.mxu0 0.0
    %185 = vmatprep.subr.mxu0 0.0
    %186 = vmatpush2.msra.mxu0 0.0
    %187 = vmatprep.subr.mxu0 0.0
    %188 = vmatpush2.msra.mxu0 0.0
    %189 = vmatprep.subr.mxu0 0.0
    %190 = vmatpush2.msra.mxu0 0.0
    %191 = vmatprep.subr.mxu0 0.0
    %192 = vmatpush2.msra.mxu0 0.0
    %193 = vmatprep.subr.mxu0 0.0
    %194 = vmatpush2.msra.mxu0 0.0
    %195 = vmatprep.subr.mxu0 0.0
    %196 = vmatpush2.msra.mxu0 0.0
    %197 = vmatprep.subr.mxu0 0.0
    %198 = vmatpush2.msra.mxu0 0.0
    %199 = vmatprep.mubr.f32.mxu0 0.0
    %200 = vmatmul.mubr.f32.gmra.mxu0 %v133
    %v201 = vpop.f32.mrf.mxu0
    %v202 = vadd.f32 0.0, %v201
    %v203 = vpop.f32.mrf.mxu0
    %204 = vdwg.mxu0
    %v205 = vsub.f32 %v202, %v131
    %v207 = vlaneseq
    %v208 = vshrl.u32 %v207, 7
    %v209 = vsub.s32 0, %v208
    %v210 = vrot.slane %v126, %v209
    %v212 = vadd.f32 %v205, %v210
    %v213 = vmin.f32 %v212, 0.0
    %v214 = vmul.f32 %v213, 1.442695
    %v215 = vpow.pop %v214
    %v216 = vld [vmem:[%s5] sm:$0x1]
    %v218 = vlaneseq
    %v219 = vshrl.u32 %v218, 7
    %v220 = vsub.s32 0, %v219
    %v221 = vrot.slane %v216, %v220
    %v223 = vmul.f32 %v215, %v221
    %v224 = vsel %vm33, %v223, 0.0
    %225 = vadd.xlane.f32.xlu0 %v224
    %v226 = vpop.xlane.xlu0 %225
    %s227 = sld [smem:[#allocation2]]
    %v228 = vstv %s227
    %v229 = vadd.f32 %v226, %v228
    %230 = vxpose.xlu0.b32.start [1/16] %v229, 128
    %231 = vxpose.xlu0.b32.cont [2/16] 0.0, 128
    %232 = vxpose.xlu0.b32.cont [3/16] 0.0, 128
    %233 = vxpose.xlu0.b32.cont [4/16] 0.0, 128
    %234 = vxpose.xlu0.b32.cont [5/16] 0.0, 128
    %235 = vxpose.xlu0.b32.cont [6/16] 0.0, 128
    %236 = vxpose.xlu0.b32.cont [7/16] 0.0, 128
    %237 = vxpose.xlu0.b32.cont [8/16] 0.0, 128
    %238 = vxpose.xlu0.b32.cont [9/16] 0.0, 128
    %239 = vxpose.xlu0.b32.cont [10/16] 0.0, 128
    %240 = vxpose.xlu0.b32.cont [11/16] 0.0, 128
    %241 = vxpose.xlu0.b32.cont [12/16] 0.0, 128
    %242 = vxpose.xlu0.b32.cont [13/16] 0.0, 128
    %243 = vxpose.xlu0.b32.cont [14/16] 0.0, 128
    %244 = vxpose.xlu0.b32.cont [15/16] 0.0, 128
    %245 = vxpose.xlu0.b32.end [16/16] 0.0, 128
    %v246 = vpop.trf.xlu0
    %v247 = vpop.trf.xlu0
    %v248 = vpop.trf.xlu0
    %v249 = vpop.trf.xlu0
    %v250 = vpop.trf.xlu0
    %v251 = vpop.trf.xlu0
    %v252 = vpop.trf.xlu0
    %v253 = vpop.trf.xlu0
    %v254 = vpop.trf.xlu0
    %v255 = vpop.trf.xlu0
    %v256 = vpop.trf.xlu0
    %v257 = vpop.trf.xlu0
    %v258 = vpop.trf.xlu0
    %v259 = vpop.trf.xlu0
    %v260 = vpop.trf.xlu0
    %v261 = vpop.trf.xlu0
    %vm262 = vcmask 57344
    %263 = vst.msk [vmem:[#allocation3] sm:$0x1] %vm262, %v246
    // Predicated region
    $region30: #{tpu_custom_call.1} parent=1 // pred_check
      _
    $region31: #{tpu_custom_call.1} parent=1 // pred_check_branch
      %265 = sbr.rel (0) target = $region33
    $region32: #{tpu_custom_call.1} parent=1 // pred_region
      %s267 = ssub.s32 16, 16
      %268 = vsyncadd [#allocation4], %s267
      %s270 = sshll.u32 [#allocation3], 4
      %s271 = int_to_ptr.vmem [resolvable:$true] %s270
      %273 = dma.vmem_to_hbm [thread:$0]  %s271, 16, %s7, [#allocation4]
    $region33: #{tpu_custom_call.1} parent=1 // pred_fallthru
      _
    // Predicated region
    $region34: #{tpu_custom_call.1} parent=1 // pred_check
      _
    $region35: #{tpu_custom_call.1} parent=1 // pred_check_branch
      %275 = sbr.rel (0) target = $region37
    $region36: #{tpu_custom_call.1} parent=1 // pred_region
      %276 = dma.done [#allocation4], 16
    $region37: #{tpu_custom_call.1} parent=1 // pred_fallthru
      _
    %277 = vsyncpa [#allocation4], 1

// kernel: tpu_custom_call.1
$region0: #{tpu_custom_call.1}
  #allocation0 [shape = 'u32[]', space=smem, size = 0x4, offset = 0x4, fixed_abs, tag = 'smem constant byte address 0x4 - core index']
  #allocation1 [shape = 'u32[144,128]{1,0:T(1,128)}', space=vmem, size = 0x12000, scoped, tag = 'internal scratch']
  #allocation2 [shape = 'f32[1]{0:T(128)S(6)}', space=smem, size = 0x200, scoped, tag = 'scoped memory for tpu_custom_call.1']
  %s0 = inlined_call_operand.vmem [shape: f32[8,16], index: 0, kind: input, shape index: {}]
  %s1 = inlined_call_operand.vmem [shape: f32[16,32], index: 1, kind: input, shape index: {}]
  %s2 = inlined_call_operand.vmem [shape: f32[1,32], index: 2, kind: input, shape index: {}]
  %s3 = inlined_call_operand.vmem [shape: f32[32,16], index: 3, kind: input, shape index: {}]
  %s4 = inlined_call_operand.vmem [shape: f32[1,16], index: 4, kind: input, shape index: {}]
  %s5 = inlined_call_operand.vmem [shape: f32[1,16], index: 5, kind: input, shape index: {}]
  %s6 = inlined_call_operand.<no memory space> [shape: f32[1], index: 6, kind: input, shape index: {}]
  %s7 = inlined_call_operand.vmem [shape: f32[8,1], index: 7, kind: output, shape index: {}]
  %s8 = sld [smem:[#allocation0]]
  $region38: #{tpu_custom_call.1} parent=0
    _
  %s10 = ssub.s32 1, %s8
  %s11 = scalar_select 0, %s10, %s8
  %12 = sst [smem:[#allocation2]] %s6
  // Predicated region
  $region2: #{tpu_custom_call.1} parent=0 // pred_check
    _
  $region3: #{tpu_custom_call.1} parent=0 // pred_check_branch
    %14 = sbr.rel (0) target = $region5
  $region4: #{tpu_custom_call.1} parent=0 // pred_region
    _
  $region5: #{tpu_custom_call.1} parent=0 // pred_fallthru
    _
  // Predicated region
  $region6: #{tpu_custom_call.1} parent=0 // pred_check
    _
  $region7: #{tpu_custom_call.1} parent=0 // pred_check_branch
    %16 = sbr.rel (0) target = $region9
  $region8: #{tpu_custom_call.1} parent=0 // pred_region
    _
  $region9: #{tpu_custom_call.1} parent=0 // pred_fallthru
    _
  // Predicated region
  $region10: #{tpu_custom_call.1} parent=0 // pred_check
    _
  $region11: #{tpu_custom_call.1} parent=0 // pred_check_branch
    %18 = sbr.rel (0) target = $region13
  $region12: #{tpu_custom_call.1} parent=0 // pred_region
    _
  $region13: #{tpu_custom_call.1} parent=0 // pred_fallthru
    _
  // Predicated region
  $region14: #{tpu_custom_call.1} parent=0 // pred_check
    _
  $region15: #{tpu_custom_call.1} parent=0 // pred_check_branch
    %20 = sbr.rel (0) target = $region17
  $region16: #{tpu_custom_call.1} parent=0 // pred_region
    _
  $region17: #{tpu_custom_call.1} parent=0 // pred_fallthru
    _
  // Predicated region
  $region18: #{tpu_custom_call.1} parent=0 // pred_check
    _
  $region19: #{tpu_custom_call.1} parent=0 // pred_check_branch
    %22 = sbr.rel (0) target = $region21
  $region20: #{tpu_custom_call.1} parent=0 // pred_region
    _
  $region21: #{tpu_custom_call.1} parent=0 // pred_fallthru
    _
  // Predicated region
  $region22: #{tpu_custom_call.1} parent=0 // pred_check
    _
  $region23: #{tpu_custom_call.1} parent=0 // pred_check_branch
    %24 = sbr.rel (0) target = $region25
  $region24: #{tpu_custom_call.1} parent=0 // pred_region
    _
  $region25: #{tpu_custom_call.1} parent=0 // pred_fallthru
    _
  // Predicated region
  $region26: #{tpu_custom_call.1} parent=0 // pred_check
    _
  $region27: #{tpu_custom_call.1} parent=0 // pred_check_branch
    %26 = sbr.rel (0) target = $region29
  $region28: #{tpu_custom_call.1} parent=0 // pred_region
    _
  $region29: #{tpu_custom_call.1} parent=0 // pred_fallthru
    _
  %v27 = vld [vmem:[%s0] sm:$0xff]
  %v28 = vld [vmem:[%s1] sm:$0xff]
  %v29 = vld [vmem:[%s1 + $0x8] sm:$0xff]
  %v30 = vld [vmem:[%s2] sm:$0x1]
  %v31 = vmul.f32 %v27, %v27
  %vm32 = vcmask 130048
  %v33 = vsel %vm32, %v31, 0.0
  %34 = vadd.xlane.f32.xlu0 %v33
  %v35 = vpop.xlane.xlu0 %34
  %v37 = vsel %vm32, %v27, 0
  %39 = vmatprep.subr.mxu0 0.0
  %40 = vmatpush1.msra.mxu0 0.0
  %41 = vmatprep.subr.mxu0 0.0
  %42 = vmatpush1.msra.mxu0 0.0
  %43 = vmatprep.subr.mxu0 0.0
  %44 = vmatpush1.msra.mxu0 0.0
  %45 = vmatprep.subr.mxu0 0.0
  %46 = vmatpush1.msra.mxu0 0.0
  %47 = vmatprep.subr.mxu0 0.0
  %48 = vmatpush1.msra.mxu0 0.0
  %49 = vmatprep.subr.mxu0 0.0
  %50 = vmatpush1.msra.mxu0 0.0
  %51 = vmatprep.subr.mxu0 0.0
  %52 = vmatpush1.msra.mxu0 0.0
  %53 = vmatprep.subr.mxu0 0.0
  %54 = vmatpush1.msra.mxu0 0.0
  %55 = vmatprep.subr.mxu0 0.0
  %56 = vmatpush1.msra.mxu0 0.0
  %57 = vmatprep.subr.mxu0 0.0
  %58 = vmatpush1.msra.mxu0 0.0
  %59 = vmatprep.subr.mxu0 0.0
  %60 = vmatpush1.msra.mxu0 0.0
  %61 = vmatprep.subr.mxu0 0.0
  %62 = vmatpush1.msra.mxu0 0.0
  %63 = vmatprep.subr.mxu0 0.0
  %64 = vmatpush1.msra.mxu0 0.0
  %65 = vmatprep.subr.mxu0 0.0
  %66 = vmatpush1.msra.mxu0 0.0
  %67 = vmatprep.subr.mxu0 0.0
  %68 = vmatpush1.msra.mxu0 %v29
  %69 = vmatprep.subr.mxu0 0.0
  %70 = vmatpush1.msra.mxu0 %v28
  %71 = vmatprep.subr.mxu0 0.0
  %72 = vmatpush2.msra.mxu0 0.0
  %73 = vmatprep.subr.mxu0 0.0
  %74 = vmatpush2.msra.mxu0 0.0
  %75 = vmatprep.subr.mxu0 0.0
  %76 = vmatpush2.msra.mxu0 0.0
  %77 = vmatprep.subr.mxu0 0.0
  %78 = vmatpush2.msra.mxu0 0.0
  %79 = vmatprep.subr.mxu0 0.0
  %80 = vmatpush2.msra.mxu0 0.0
  %81 = vmatprep.subr.mxu0 0.0
  %82 = vmatpush2.msra.mxu0 0.0
  %83 = vmatprep.subr.mxu0 0.0
  %84 = vmatpush2.msra.mxu0 0.0
  %85 = vmatprep.subr.mxu0 0.0
  %86 = vmatpush2.msra.mxu0 0.0
  %87 = vmatprep.subr.mxu0 0.0
  %88 = vmatpush2.msra.mxu0 0.0
  %89 = vmatprep.subr.mxu0 0.0
  %90 = vmatpush2.msra.mxu0 0.0
  %91 = vmatprep.subr.mxu0 0.0
  %92 = vmatpush2.msra.mxu0 0.0
  %93 = vmatprep.subr.mxu0 0.0
  %94 = vmatpush2.msra.mxu0 0.0
  %95 = vmatprep.subr.mxu0 0.0
  %96 = vmatpush2.msra.mxu0 0.0
  %97 = vmatprep.subr.mxu0 0.0
  %98 = vmatpush2.msra.mxu0 0.0
  %99 = vmatprep.subr.mxu0 0.0
  %100 = vmatpush2.msra.mxu0 0.0
  %101 = vmatprep.subr.mxu0 0.0
  %102 = vmatpush2.msra.mxu0 0.0
  %103 = vmatprep.mubr.f32.mxu0 0.0
  %104 = vmatmul.mubr.f32.gmra.mxu0 %v37
  %v105 = vpop.f32.mrf.mxu0
  %v106 = vadd.f32 0.0, %v105
  %v107 = vpop.f32.mrf.mxu0
  %108 = vdwg.mxu0
  %v109 = vmul.f32 %v35, 0.5
  %v110 = vsub.f32 %v106, %v109
  %v112 = vlaneseq
  %v113 = vshrl.u32 %v112, 7
  %v114 = vsub.s32 0, %v113
  %v115 = vrot.slane %v30, %v114
  %v117 = vadd.f32 %v110, %v115
  %v118 = vmin.f32 %v117, 0.0
  %v119 = vmul.f32 %v118, 1.442695
  %v120 = vpow.pop %v119
  %v121 = vld [vmem:[%s3] sm:$0xff]
  %v122 = vld [vmem:[%s3 + $0x8] sm:$0xff]
  %v123 = vld [vmem:[%s3 + $0x10] sm:$0xff]
  %v124 = vld [vmem:[%s3 + $0x18] sm:$0xff]
  %v125 = vld [vmem:[%s4] sm:$0x1]
  %v126 = vmul.f32 %v120, %v120
  %vm127 = vcmask 261120
  %v128 = vsel %vm127, %v126, 0.0
  %129 = vadd.xlane.f32.xlu0 %v128
  %v130 = vpop.xlane.xlu0 %129
  %v132 = vsel %vm127, %v120, 0
  %134 = vmatprep.subr.mxu0 0.0
  %135 = vmatpush1.msra.mxu0 0.0
  %136 = vmatprep.subr.mxu0 0.0
  %137 = vmatpush1.msra.mxu0 0.0
  %138 = vmatprep.subr.mxu0 0.0
  %139 = vmatpush1.msra.mxu0 0.0
  %140 = vmatprep.subr.mxu0 0.0
  %141 = vmatpush1.msra.mxu0 0.0
  %142 = vmatprep.subr.mxu0 0.0
  %143 = vmatpush1.msra.mxu0 0.0
  %144 = vmatprep.subr.mxu0 0.0
  %145 = vmatpush1.msra.mxu0 0.0
  %146 = vmatprep.subr.mxu0 0.0
  %147 = vmatpush1.msra.mxu0 0.0
  %148 = vmatprep.subr.mxu0 0.0
  %149 = vmatpush1.msra.mxu0 0.0
  %150 = vmatprep.subr.mxu0 0.0
  %151 = vmatpush1.msra.mxu0 0.0
  %152 = vmatprep.subr.mxu0 0.0
  %153 = vmatpush1.msra.mxu0 0.0
  %154 = vmatprep.subr.mxu0 0.0
  %155 = vmatpush1.msra.mxu0 0.0
  %156 = vmatprep.subr.mxu0 0.0
  %157 = vmatpush1.msra.mxu0 0.0
  %158 = vmatprep.subr.mxu0 0.0
  %159 = vmatpush1.msra.mxu0 %v124
  %160 = vmatprep.subr.mxu0 0.0
  %161 = vmatpush1.msra.mxu0 %v123
  %162 = vmatprep.subr.mxu0 0.0
  %163 = vmatpush1.msra.mxu0 %v122
  %164 = vmatprep.subr.mxu0 0.0
  %165 = vmatpush1.msra.mxu0 %v121
  %166 = vmatprep.subr.mxu0 0.0
  %167 = vmatpush2.msra.mxu0 0.0
  %168 = vmatprep.subr.mxu0 0.0
  %169 = vmatpush2.msra.mxu0 0.0
  %170 = vmatprep.subr.mxu0 0.0
  %171 = vmatpush2.msra.mxu0 0.0
  %172 = vmatprep.subr.mxu0 0.0
  %173 = vmatpush2.msra.mxu0 0.0
  %174 = vmatprep.subr.mxu0 0.0
  %175 = vmatpush2.msra.mxu0 0.0
  %176 = vmatprep.subr.mxu0 0.0
  %177 = vmatpush2.msra.mxu0 0.0
  %178 = vmatprep.subr.mxu0 0.0
  %179 = vmatpush2.msra.mxu0 0.0
  %180 = vmatprep.subr.mxu0 0.0
  %181 = vmatpush2.msra.mxu0 0.0
  %182 = vmatprep.subr.mxu0 0.0
  %183 = vmatpush2.msra.mxu0 0.0
  %184 = vmatprep.subr.mxu0 0.0
  %185 = vmatpush2.msra.mxu0 0.0
  %186 = vmatprep.subr.mxu0 0.0
  %187 = vmatpush2.msra.mxu0 0.0
  %188 = vmatprep.subr.mxu0 0.0
  %189 = vmatpush2.msra.mxu0 0.0
  %190 = vmatprep.subr.mxu0 0.0
  %191 = vmatpush2.msra.mxu0 0.0
  %192 = vmatprep.subr.mxu0 0.0
  %193 = vmatpush2.msra.mxu0 0.0
  %194 = vmatprep.subr.mxu0 0.0
  %195 = vmatpush2.msra.mxu0 0.0
  %196 = vmatprep.subr.mxu0 0.0
  %197 = vmatpush2.msra.mxu0 0.0
  %198 = vmatprep.mubr.f32.mxu0 0.0
  %199 = vmatmul.mubr.f32.gmra.mxu0 %v132
  %v200 = vpop.f32.mrf.mxu0
  %v201 = vadd.f32 0.0, %v200
  %v202 = vpop.f32.mrf.mxu0
  %203 = vdwg.mxu0
  %v204 = vsub.f32 %v201, %v130
  %v206 = vlaneseq
  %v207 = vshrl.u32 %v206, 7
  %v208 = vsub.s32 0, %v207
  %v209 = vrot.slane %v125, %v208
  %v211 = vadd.f32 %v204, %v209
  %v212 = vmin.f32 %v211, 0.0
  %v213 = vmul.f32 %v212, 1.442695
  %v214 = vpow.pop %v213
  %v215 = vld [vmem:[%s5] sm:$0x1]
  %v217 = vlaneseq
  %v218 = vshrl.u32 %v217, 7
  %v219 = vsub.s32 0, %v218
  %v220 = vrot.slane %v215, %v219
  %v222 = vmul.f32 %v214, %v220
  %v223 = vsel %vm32, %v222, 0.0
  %224 = vadd.xlane.f32.xlu0 %v223
  %v225 = vpop.xlane.xlu0 %224
  %s226 = sld [smem:[#allocation2]]
  %v227 = vstv %s226
  %v228 = vadd.f32 %v225, %v227
  %vm229 = vcmask 7168
  %230 = vst.msk [vmem:[%s7] sm:$0xff] %vm229, %v228
  // Predicated region
  $region30: #{tpu_custom_call.1} parent=0 // pred_check
    _
  $region31: #{tpu_custom_call.1} parent=0 // pred_check_branch
    %232 = sbr.rel (0) target = $region33
  $region32: #{tpu_custom_call.1} parent=0 // pred_region
    _
  $region33: #{tpu_custom_call.1} parent=0 // pred_fallthru
    _
  // Predicated region
  $region34: #{tpu_custom_call.1} parent=0 // pred_check
    _
  $region35: #{tpu_custom_call.1} parent=0 // pred_check_branch
    %234 = sbr.rel (0) target = $region37
  $region36: #{tpu_custom_call.1} parent=0 // pred_region
    _
  $region37: #{tpu_custom_call.1} parent=0 // pred_fallthru
    _

</llo_original>
